<compile_context>
chip_gen: v7x
topology: tpu7x:2x2x1
jax: 0.10.0
libtpu: 0.0.40
codegen_flags: <defaults>
</compile_context>

<pallas_src>
import math

import jax
import jax.numpy as jnp
import numpy as np
from jax.experimental import pallas as pl
from jax.experimental.pallas import tpu as pltpu

LANE = 128
SUBLANE = 8
TARGET_ROWS = 2048                 # (2048, 128) f32 block = 1 MiB per pipeline buffer
_SMALL_FASTPATH_ELEMS = 512 * 1024 # below this, fused XLA beats a pallas_call launch


# ---------------------------------------------------------------------------
# Kernels (pure VPU elementwise; HBM-bandwidth-bound)
# ---------------------------------------------------------------------------
def _sub_sub_kernel(a_ref, b_ref, o_ref):
    # c = a - b ; out = c - c  (kept explicit so NaN/Inf propagate like torch)
    c = a_ref[...].astype(o_ref.dtype) - b_ref[...].astype(o_ref.dtype)
    o_ref[...] = c - c


def _sub_scalar_sub_kernel(s_ref, x_ref, o_ref):
    # c = x - s ; out = c - c.  NaN/Inf positions in c are identical whichever
    # operand is the size-1 one, so one kernel covers both broadcast directions.
    c = x_ref[...].astype(o_ref.dtype) - s_ref[0].astype(o_ref.dtype)
    o_ref[...] = c - c


def _square_sub_scalar_kernel(s_ref, a_ref, o_ref):
    # out = a * a - scalar   (scalar lives in SMEM)
    sq = (a_ref[...] * a_ref[...]).astype(o_ref.dtype)
    o_ref[...] = sq - s_ref[0].astype(o_ref.dtype)


# ---------------------------------------------------------------------------
# Helpers
# ---------------------------------------------------------------------------
def _round_up(x, m):
    return ((x + m - 1) // m) * m


def _choose_block_rows(rows):
    """Row-block size for a (rows, 128) lane-dense slab.

    ceil(rows/4) rounded up to a sublane multiple -> >=4 grid steps when
    possible (keeps both v7x TensorCores busy on the "parallel" axis), capped
    at TARGET_ROWS (1 MiB f32 buffer) so the double-buffered 3-array tensor
    branch stays well inside v5e's 16 MiB scoped-VMEM default.
    """
    quarter = _round_up(max(1, -(-rows // 4)), SUBLANE)
    return max(SUBLANE, min(TARGET_ROWS, quarter))


def _elemwise_cost(n_elems, in_dtypes, out_dtype):
    bytes_acc = n_elems * (sum(np.dtype(d).itemsize for d in in_dtypes)
                           + np.dtype(out_dtype).itemsize)
    return pl.CostEstimate(flops=2 * n_elems, transcendentals=0,
                           bytes_accessed=int(bytes_acc))


def _lane_dense_call(kernel, arrays, smem_scalar, out_dtype, out_shape):
    """Run `kernel` over `arrays` reshaped to (rows, 128) with a 1-D parallel grid.

    No padding / no output slicing: the final block may overhang the array;
    Pallas pads OOB reads and drops OOB writes.  Caller guarantees that the
    total element count is a multiple of 128 and all arrays share `out_shape`.
    """
    n = math.prod(out_shape)
    rows = n // LANE
    br = _choose_block_rows(rows)
    grid = pl.cdiv(rows, br)
    tiled_spec = pl.BlockSpec((br, LANE), lambda i: (i, 0))

    in_specs, operands = [], []
    if smem_scalar is not None:
        in_specs.append(pl.BlockSpec(memory_space=pltpu.MemorySpace.SMEM))
        operands.append(smem_scalar)
    for arr in arrays:
        in_specs.append(tiled_spec)
        operands.append(arr.reshape(rows, LANE))

    out2d = pl.pallas_call(
        kernel,
        out_shape=jax.ShapeDtypeStruct((rows, LANE), out_dtype),
        grid=(grid,),
        in_specs=in_specs,
        out_specs=tiled_spec,
        compiler_params=pltpu.CompilerParams(
            dimension_semantics=("parallel",)),
        cost_estimate=_elemwise_cost(n, [a.dtype for a in arrays], out_dtype),
    )(*operands)
    return out2d.reshape(out_shape)


# ---------------------------------------------------------------------------
# Wrapper reproducing SimpleSubtractModel.forward
# ---------------------------------------------------------------------------
def simple_subtract(a, b, *, min_pallas_elems=_SMALL_FASTPATH_ELEMS):
    a = jnp.asarray(a)
    b = jnp.asarray(b)

    # ---- scalar branch: b is a 0-d tensor -> (a * a).sub(b.item()) ----------
    if b.ndim == 0:
        if jnp.issubdtype(b.dtype, jnp.floating) and not jnp.issubdtype(a.dtype, jnp.floating):
            out_dtype = jnp.float32   # torch: int tensor - python float -> default float
        else:
            out_dtype = a.dtype       # weak python scalar keeps a's dtype
        n = a.size
        if n < min_pallas_elems or n % LANE != 0:
            # Fused-XLA fast path: small inputs (launch cost dominates) and
            # lane-unaligned tails (a pad would add a full extra HBM pass).
            return (a * a).astype(out_dtype) - b.astype(out_dtype)
        sdt = jnp.float32 if jnp.issubdtype(out_dtype, jnp.floating) else jnp.int32
        scalar = b.astype(sdt).reshape(1)
        return _lane_dense_call(_square_sub_scalar_kernel, [a], scalar,
                                out_dtype, tuple(a.shape))

    # ---- tensor branch: c = a - b ; return c - c (with broadcasting) --------
    out_shape = tuple(jnp.broadcast_shapes(a.shape, b.shape))
    out_dtype = jnp.result_type(a, b)
    n = math.prod(out_shape)

    if n < min_pallas_elems or n % LANE != 0:
        # Fused XLA: broadcast + both subs in one pass, no HBM materialisation.
        c = a.astype(out_dtype) - b.astype(out_dtype)
        return c - c

    if a.shape == b.shape:
        return _lane_dense_call(_sub_sub_kernel, [a, b], None, out_dtype, out_shape)

    # One operand has a single element: pass it via SMEM instead of
    # materialising a broadcast copy in HBM.
    if (b.size == 1 or a.size == 1) and jnp.issubdtype(out_dtype, jnp.floating):
        big, small = (a, b) if b.size == 1 else (b, a)
        big = jnp.broadcast_to(big, out_shape)   # same element count: pure reshape
        scalar = small.astype(jnp.float32).reshape(1)
        return _lane_dense_call(_sub_scalar_sub_kernel, [big], scalar,
                                out_dtype, out_shape)

    # TODO(synk): fold general ND broadcasting into BlockSpec index_maps
    # (constant block index on broadcast axes).  The XLA fallback below also
    # avoids materialising the expanded operand in HBM (broadcast is fused).
    c = a.astype(out_dtype) - b.astype(out_dtype)
    return c - c


# ---------------------------------------------------------------------------
# Main
# ---------------------------------------------------------------------------
if __name__ == "__main__":
    key = jax.random.PRNGKey(0)
    ka, kb, ks, kc, kd = jax.random.split(key, 5)

    # 1) Small NCHW tensor branch, default routing (fused-XLA fast path).
    a_small = jax.random.normal(ka, (2, 4, 16, 16), dtype=jnp.float32)
    b_small = jax.random.normal(kb, (2, 4, 16, 16), dtype=jnp.float32)
    out = simple_subtract(a_small, b_small)
    jax.block_until_ready(out)
    assert out.shape == (2, 4, 16, 16)
    assert jnp.allclose(out, jnp.zeros_like(out))

    # 2) Same small shape forced through the Pallas tensor kernel (grid of 2).
    out_pl = simple_subtract(a_small, b_small, min_pallas_elems=0)
    jax.block_until_ready(out_pl)
    assert jnp.allclose(out_pl, jnp.zeros_like(out_pl))

    # 3) Scalar branch (0-d b) forced through the Pallas kernel.
    b_scalar = jax.random.normal(ks, (), dtype=jnp.float32)
    out_sc = simple_subtract(a_small, b_scalar, min_pallas_elems=0)
    jax.block_until_ready(out_sc)
    assert jnp.allclose(out_sc, a_small * a_small - b_scalar, atol=1e-6)

    # 4) Size-1 (non-0-d) b: SMEM-scalar tensor branch, no broadcast in HBM.
    b_one = jax.random.normal(ks, (1,), dtype=jnp.float32)
    out_b1 = simple_subtract(a_small, b_one, min_pallas_elems=0)
    jax.block_until_ready(out_b1)
    assert out_b1.shape == (2, 4, 16, 16)
    assert jnp.allclose(out_b1, jnp.zeros_like(out_b1))

    # 5) Large shape (1M elems): default Pallas path, 4 x 2048-row blocks.
    a_big = jax.random.normal(kc, (8, 16, 64, 128), dtype=jnp.float32)
    b_big = jax.random.normal(kd, (8, 16, 64, 128), dtype=jnp.float32)
    out_big = simple_subtract(a_big, b_big)
    jax.block_until_ready(out_big)
    assert jnp.allclose(out_big, jnp.zeros_like(out_big))
    out_big_sc = simple_subtract(a_big, b_scalar)
    jax.block_until_ready(out_big_sc)
    assert jnp.allclose(out_big_sc, a_big * a_big - b_scalar, atol=1e-6)

    # 6) Ragged row count (260 rows, 72-row blocks): final block overhangs.
    a_rag = jax.random.normal(ka, (5, 4, 13, 128), dtype=jnp.float32)
    b_rag = jax.random.normal(kb, (5, 4, 13, 128), dtype=jnp.float32)
    out_rag = simple_subtract(a_rag, b_rag, min_pallas_elems=0)
    jax.block_until_ready(out_rag)
    assert jnp.allclose(out_rag, jnp.zeros_like(out_rag))
    out_rag_sc = simple_subtract(a_rag, b_scalar, min_pallas_elems=0)
    jax.block_until_ready(out_rag_sc)
    assert jnp.allclose(out_rag_sc, a_rag * a_rag - b_scalar, atol=1e-6)

    # 7) Lane-unaligned element count: routed to fused XLA (no pad/slice).
    a_odd = jax.random.normal(ka, (2, 3, 17, 19), dtype=jnp.float32)
    out_odd = simple_subtract(a_odd, b_scalar, min_pallas_elems=0)
    jax.block_until_ready(out_odd)
    assert jnp.allclose(out_odd, a_odd * a_odd - b_scalar, atol=1e-6)

    print("KERNEL_OK")
</pallas_src>

<mosaic_0001>
module attributes {stable_mosaic.version = 11 : i64} {
  func.func @_sub_sub_kernel(%arg0: i32, %arg1: memref<8x128xf32, #tpu.memory_space<vmem>>, %arg2: memref<8x128xf32, #tpu.memory_space<vmem>>, %arg3: memref<8x128xf32, #tpu.memory_space<vmem>>) attributes {dimension_semantics = [#tpu.dimension_semantics<parallel>], iteration_bounds = array<i64: 2>, scalar_prefetch = 0 : i64, scratch_operands = 0 : i64, tpu.core_type = #tpu.core_type<tc>, window_params = [{transform_indices = @transform_0, window_bounds = array<i64: 8, 128>}, {transform_indices = @transform_1, window_bounds = array<i64: 8, 128>}, {transform_indices = @transform_2, window_bounds = array<i64: 8, 128>}]} {
    %c0 = arith.constant 0 : index
    %c0_0 = arith.constant 0 : index
    %0 = vector.load %arg1[%c0, %c0_0] : memref<8x128xf32, #tpu.memory_space<vmem>>, vector<8x128xf32>
    %c0_1 = arith.constant 0 : index
    %c0_2 = arith.constant 0 : index
    %1 = vector.load %arg2[%c0_1, %c0_2] : memref<8x128xf32, #tpu.memory_space<vmem>>, vector<8x128xf32>
    %2 = arith.subf %0, %1 : vector<8x128xf32>
    %3 = arith.subf %2, %2 : vector<8x128xf32>
    %c0_3 = arith.constant 0 : index
    %c0_4 = arith.constant 0 : index
    %4 = vector.load %arg3[%c0_3, %c0_4] : memref<8x128xf32, #tpu.memory_space<vmem>>, vector<8x128xf32>
    tpu.vector_store %arg3[%c0_3, %c0_4], %3 {strides = array<i32>} : memref<8x128xf32, #tpu.memory_space<vmem>>, vector<8x128xf32>,
    return
  }
  func.func @transform_0(%arg0: i32) -> (i32, i32) {
    %c0_i32 = arith.constant 0 : i32
    %c0_i32_0 = arith.constant 0 : i32
    return %arg0, %c0_i32 : i32, i32
  }
  func.func @transform_1(%arg0: i32) -> (i32, i32) {
    %c0_i32 = arith.constant 0 : i32
    %c0_i32_0 = arith.constant 0 : i32
    return %arg0, %c0_i32 : i32, i32
  }
  func.func @transform_2(%arg0: i32) -> (i32, i32) {
    %c0_i32 = arith.constant 0 : i32
    %c0_i32_0 = arith.constant 0 : i32
    return %arg0, %c0_i32 : i32, i32
  }
}

</mosaic_0001>

<llo_original>
// kernel: tpu_custom_call.1
$region0: #{tpu_custom_call.1}
  #allocation0 [shape = 'u32[]', space=smem, size = 0x4, offset = 0x4, fixed_abs, tag = 'smem constant byte address 0x4 - core index']
  #allocation1 [shape = 'u32[144,128]{1,0:T(1,128)}', space=vmem, size = 0x12000, scoped, tag = 'internal scratch']
  %s0 = inlined_call_operand.hbm [shape: f32[16,128], index: 0, kind: input, shape index: {}]
  %s1 = inlined_call_operand.hbm [shape: f32[16,128], index: 1, kind: input, shape index: {}]
  %s2 = inlined_call_operand.hbm [shape: f32[16,128], index: 2, kind: output, shape index: {}]
  %s3 = sld [smem:[#allocation0]]
  $region49: #{tpu_custom_call.1} parent=0
    _
  %s5 = ssub.s32 1, %s3
  %s6 = scalar_select 0, %s5, %s3
  $region1: #{tpu_custom_call.1} parent=0
    #allocation2 [shape = 'u8[8192]{0}', space=vmem, size = 0x2000, scoped, tag = 'input window, operand 0']
    #allocation3 [shape = 's32[2]{0}', space=sflag, size = 0x8, scoped, tag = 'scoped memory for tpu_custom_call.1']
    #allocation4 [shape = 's32[2]{0}', space=sflag, size = 0x8, scoped, tag = 'scoped memory for tpu_custom_call.1']
    #allocation5 [shape = 'u8[8192]{0}', space=vmem, size = 0x2000, scoped, tag = 'input window, operand 1']
    #allocation6 [shape = 's32[2]{0}', space=sflag, size = 0x8, scoped, tag = 'scoped memory for tpu_custom_call.1']
    #allocation7 [shape = 'u8[8192]{0}', space=vmem, size = 0x2000, scoped, tag = 'output window, operand 0']
    %7 = vsyncpa [#allocation3], 0
    %s8 = scalar_lea.sflag [#allocation3], 1
    %9 = vsyncpa %s8, 0
    %10 = vsyncpa [#allocation6], 0
    %s11 = scalar_lea.sflag [#allocation6], 1
    %12 = vsyncpa %s11, 0
    %13 = vsyncpa [#allocation4], 0
    %s14 = scalar_lea.sflag [#allocation4], 1
    %15 = vsyncpa %s14, 0
    loop: start=0, step=1, limit=4
    $region2: #{tpu_custom_call.1} parent=1 // loop_pre_header
      _
    $region3: #{tpu_custom_call.1} parent=1 // loop_header
      %s17 = sphi 0, %s21
      %p18 = scmp.ge.s32.totalorder %s17, 4
      %s27 = sphi 0, %s29
      %s30 = sphi 0, %s27
      %s31 = sphi 0, %s30
      %s47 = sphi 0, %s31
      %s53 = sphi 0, %s55
      %s56 = sphi 0, %s53
      %s57 = sphi 0, %s56
      %s73 = sphi 0, %s57
      %s79 = sphi 0, %s81
      %s82 = sphi 0, %s79
      %s83 = sphi 0, %s82
      %s99 = sphi 0, %s83
    $region4: #{tpu_custom_call.1} parent=1 // loop_header_branch
      %20 = sbr.rel (%p18) target = $region8
    $region5: #{tpu_custom_call.1} parent=1 // loop_body
      %s22 = ssub.s32 %s17, 1
      %s23 = ssub.s32 %s17, 2
      %s24 = sadd.s32 %s17, 1
      %s25 = ssub.s32 %s17, %s24
      %p26 = scmp.eq.s32.totalorder %s25, 0
      %s28 = sadd.s32 %s27, 1
      %s29 = scalar_select %p26, %s27, %s28
      %p32 = pneg %p26
      %p33 = scmp.eq.s32.totalorder %s17, 1
      %p34 = por %p32, %p33
      %p35 = scmp.ne.s32.totalorder %s27, %s30
      %p36 = scmp.eq.s32.totalorder %s17, 0
      %p37 = por %p35, %p36
      %p38 = scmp.ne.s32.totalorder %s27, %s30
      %p39 = scmp.eq.s32.totalorder %s22, 1
      %p40 = por %p38, %p39
      %p41 = scmp.ne.s32.totalorder %s30, %s31
      %p42 = scmp.eq.s32.totalorder %s22, 0
      %p43 = por %p41, %p42
      %p44 = scmp.ne.s32.totalorder %s30, %s31
      %p45 = scmp.eq.s32.totalorder %s23, 1
      %p46 = por %p44, %p45
      %p48 = scmp.ne.s32.totalorder %s31, %s47
      %p49 = scmp.eq.s32.totalorder %s23, 0
      %p50 = por %p48, %p49
      %s51 = ssub.s32 %s17, %s24
      %p52 = scmp.eq.s32.totalorder %s51, 0
      %s54 = sadd.s32 %s53, 1
      %s55 = scalar_select %p52, %s53, %s54
      %p58 = pneg %p52
      %p59 = scmp.eq.s32.totalorder %s17, 1
      %p60 = por %p58, %p59
      %p61 = scmp.ne.s32.totalorder %s53, %s56
      %p62 = scmp.eq.s32.totalorder %s17, 0
      %p63 = por %p61, %p62
      %p64 = scmp.ne.s32.totalorder %s53, %s56
      %p65 = scmp.eq.s32.totalorder %s22, 1
      %p66 = por %p64, %p65
      %p67 = scmp.ne.s32.totalorder %s56, %s57
      %p68 = scmp.eq.s32.totalorder %s22, 0
      %p69 = por %p67, %p68
      %p70 = scmp.ne.s32.totalorder %s56, %s57
      %p71 = scmp.eq.s32.totalorder %s23, 1
      %p72 = por %p70, %p71
      %p74 = scmp.ne.s32.totalorder %s57, %s73
      %p75 = scmp.eq.s32.totalorder %s23, 0
      %p76 = por %p74, %p75
      %s77 = ssub.s32 %s17, %s24
      %p78 = scmp.eq.s32.totalorder %s77, 0
      %s80 = sadd.s32 %s79, 1
      %s81 = scalar_select %p78, %s79, %s80
      %p84 = pneg %p78
      %p85 = scmp.eq.s32.totalorder %s17, 1
      %p86 = por %p84, %p85
      %p87 = scmp.ne.s32.totalorder %s79, %s82
      %p88 = scmp.eq.s32.totalorder %s17, 0
      %p89 = por %p87, %p88
      %p90 = scmp.ne.s32.totalorder %s79, %s82
      %p91 = scmp.eq.s32.totalorder %s22, 1
      %p92 = por %p90, %p91
      %p93 = scmp.ne.s32.totalorder %s82, %s83
      %p94 = scmp.eq.s32.totalorder %s22, 0
      %p95 = por %p93, %p94
      %p96 = scmp.ne.s32.totalorder %s82, %s83
      %p97 = scmp.eq.s32.totalorder %s23, 1
      %p98 = por %p96, %p97
      %p100 = scmp.ne.s32.totalorder %s83, %s99
      %p101 = scmp.eq.s32.totalorder %s23, 0
      %p102 = por %p100, %p101
      %p103 = scmp.le.s32.totalorder 1, %s17
      %p104 = scmp.lt.s32.totalorder %s17, 3
      %p105 = pnand %p103, %p104
      %p106 = pneg %p105
      // Predicated region
      $region9: #{tpu_custom_call.1} parent=5 // pred_check
        _
      $region10: #{tpu_custom_call.1} parent=5 // pred_check_branch
        %108 = sbr.rel (%p105) target = $region12
      $region11: #{tpu_custom_call.1} parent=5 // pred_region
        %s109 = ssub.s32 %s17, 1
      $region12: #{tpu_custom_call.1} parent=5 // pred_fallthru
        _
      %p110 = scmp.lt.s32.totalorder %s17, 2
      // Predicated region
      $region13: #{tpu_custom_call.1} parent=5 // pred_check
        %p111 = pneg %p110
      $region14: #{tpu_custom_call.1} parent=5 // pred_check_branch
        %113 = sbr.rel (%p111) target = $region16
      $region15: #{tpu_custom_call.1} parent=5 // pred_region
        // Predicated region
        $region17: #{tpu_custom_call.1} parent=15 // pred_check
          %p114 = pneg %p37
        $region18: #{tpu_custom_call.1} parent=15 // pred_check_branch
          %116 = sbr.rel (%p114) target = $region20
        $region19: #{tpu_custom_call.1} parent=15 // pred_region
          %s117 = sand.u32 %s27, 1
          %s118 = scalar_lea.sflag [#allocation3], %s117
          %s119 = sand.u32 %s27, 1
          %s120 = smul.addr %s119, 8
          %s121 = scalar_lea.vmem [#allocation2], %s120
          %s123 = ssub.s32 128, 128
          %124 = vsyncadd %s118, %s123
          %s125 = smul.addr %s17, 128
          %s126 = scalar_lea.hbm %s0, %s125
          %s128 = sshll.u32 %s121, 4
          %s129 = int_to_ptr.vmem [resolvable:$true] %s128
          %131 = dma.hbm_to_vmem [thread:$0]  %s126, 128, %s129, %s118
        $region20: #{tpu_custom_call.1} parent=15 // pred_fallthru
          _
        // Predicated region
        $region21: #{tpu_custom_call.1} parent=15 // pred_check
          %p132 = pneg %p63
        $region22: #{tpu_custom_call.1} parent=15 // pred_check_branch
          %134 = sbr.rel (%p132) target = $region24
        $region23: #{tpu_custom_call.1} parent=15 // pred_region
          %s135 = sand.u32 %s53, 1
          %s136 = scalar_lea.sflag [#allocation6], %s135
          %s137 = sand.u32 %s53, 1
          %s138 = smul.addr %s137, 8
          %s139 = scalar_lea.vmem [#allocation5], %s138
          %s141 = ssub.s32 128, 128
          %142 = vsyncadd %s136, %s141
          %s143 = smul.addr %s17, 128
          %s144 = scalar_lea.hbm %s1, %s143
          %s146 = sshll.u32 %s139, 4
          %s147 = int_to_ptr.vmem [resolvable:$true] %s146
          %149 = dma.hbm_to_vmem [thread:$0]  %s144, 128, %s147, %s136
        $region24: #{tpu_custom_call.1} parent=15 // pred_fallthru
          _
      $region16: #{tpu_custom_call.1} parent=5 // pred_fallthru
        _
      %p150 = scmp.le.s32.totalorder 1, %s17
      %p151 = scmp.lt.s32.totalorder %s17, 3
      %p152 = pnand %p150, %p151
      %p153 = pneg %p152
      // Predicated region
      $region25: #{tpu_custom_call.1} parent=5 // pred_check
        _
      $region26: #{tpu_custom_call.1} parent=5 // pred_check_branch
        %155 = sbr.rel (%p152) target = $region28
      $region27: #{tpu_custom_call.1} parent=5 // pred_region
        %s156 = ssub.s32 %s17, 1
        %s157 = sand.u32 %s30, 1
        %s158 = scalar_lea.sflag [#allocation3], %s157
        %s159 = sand.u32 %s30, 1
        %s160 = smul.addr %s159, 8
        %s161 = scalar_lea.vmem [#allocation2], %s160
        // Predicated region
        $region29: #{tpu_custom_call.1} parent=27 // pred_check
          %p162 = pneg %p43
        $region30: #{tpu_custom_call.1} parent=27 // pred_check_branch
          %164 = sbr.rel (%p162) target = $region32
        $region31: #{tpu_custom_call.1} parent=27 // pred_region
          %165 = dma.done %s158, 128
        $region32: #{tpu_custom_call.1} parent=27 // pred_fallthru
          _
        %s166 = sand.u32 %s56, 1
        %s167 = scalar_lea.sflag [#allocation6], %s166
        %s168 = sand.u32 %s56, 1
        %s169 = smul.addr %s168, 8
        %s170 = scalar_lea.vmem [#allocation5], %s169
        // Predicated region
        $region33: #{tpu_custom_call.1} parent=27 // pred_check
          %p171 = pneg %p69
        $region34: #{tpu_custom_call.1} parent=27 // pred_check_branch
          %173 = sbr.rel (%p171) target = $region36
        $region35: #{tpu_custom_call.1} parent=27 // pred_region
          %174 = dma.done %s167, 128
        $region36: #{tpu_custom_call.1} parent=27 // pred_fallthru
          _
        %s175 = sand.u32 %s30, 1
        %s176 = scalar_lea.sflag [#allocation3], %s175
        %s177 = sand.u32 %s30, 1
        %s178 = smul.addr %s177, 8
        %s179 = scalar_lea.vmem [#allocation2], %s178
        %p180 = pneg %p43
        %p181 = pneg %p40
        %s182 = sand.u32 %s56, 1
        %s183 = scalar_lea.sflag [#allocation6], %s182
        %s184 = sand.u32 %s56, 1
        %s185 = smul.addr %s184, 8
        %s186 = scalar_lea.vmem [#allocation5], %s185
        %p187 = pneg %p69
        %p188 = pneg %p66
        %p189 = pneg %p95
        %p190 = pneg %p92
        %s191 = sand.u32 %s82, 1
        %s192 = scalar_lea.sflag [#allocation4], %s191
        %s193 = sand.u32 %s82, 1
        %s194 = smul.addr %s193, 8
        %s195 = scalar_lea.vmem [#allocation7], %s194
        %v196 = vld [vmem:[%s161] sm:$0xff]
        %v197 = vld [vmem:[%s170] sm:$0xff]
        %v198 = vsub.f32 %v196, %v197
        %v199 = vsub.f32 %v198, %v198
        %200 = vst [vmem:[%s195] sm:$0xff] %v199
        %s201 = sand.u32 %s82, 1
        %s202 = scalar_lea.sflag [#allocation4], %s201
        %s203 = sand.u32 %s82, 1
        %s204 = smul.addr %s203, 8
        %s205 = scalar_lea.vmem [#allocation7], %s204
        // Predicated region
        $region37: #{tpu_custom_call.1} parent=27 // pred_check
          %p206 = pneg %p92
        $region38: #{tpu_custom_call.1} parent=27 // pred_check_branch
          %208 = sbr.rel (%p206) target = $region40
        $region39: #{tpu_custom_call.1} parent=27 // pred_region
          %s210 = ssub.s32 128, 128
          %211 = vsyncadd %s202, %s210
          %s212 = smul.addr %s22, 128
          %s213 = scalar_lea.hbm %s2, %s212
          %s215 = sshll.u32 %s205, 4
          %s216 = int_to_ptr.vmem [resolvable:$true] %s215
          %218 = dma.vmem_to_hbm [thread:$0]  %s216, 128, %s213, %s202
        $region40: #{tpu_custom_call.1} parent=27 // pred_fallthru
          _
      $region28: #{tpu_custom_call.1} parent=5 // pred_fallthru
        _
      %p219 = scmp.le.s32.totalorder 2, %s17
      // Predicated region
      $region41: #{tpu_custom_call.1} parent=5 // pred_check
        %p220 = pneg %p219
      $region42: #{tpu_custom_call.1} parent=5 // pred_check_branch
        %222 = sbr.rel (%p220) target = $region44
      $region43: #{tpu_custom_call.1} parent=5 // pred_region
        %s223 = ssub.s32 %s17, 2
        // Predicated region
        $region45: #{tpu_custom_call.1} parent=43 // pred_check
          %p224 = pneg %p98
        $region46: #{tpu_custom_call.1} parent=43 // pred_check_branch
          %226 = sbr.rel (%p224) target = $region48
        $region47: #{tpu_custom_call.1} parent=43 // pred_region
          %s227 = sand.u32 %s83, 1
          %s228 = scalar_lea.sflag [#allocation4], %s227
          %s229 = sand.u32 %s83, 1
          %s230 = smul.addr %s229, 8
          %s231 = scalar_lea.vmem [#allocation7], %s230
          %232 = dma.done %s228, 128
        $region48: #{tpu_custom_call.1} parent=43 // pred_fallthru
          _
      $region44: #{tpu_custom_call.1} parent=5 // pred_fallthru
        _
    $region6: #{tpu_custom_call.1} parent=1 // loop_footer
      %s21 = sadd.s32 1, %s17
    $region7: #{tpu_custom_call.1} parent=1 // loop_footer_branch
      %16 = sbr.rel target = $region3
    $region8: #{tpu_custom_call.1} parent=1 // loop_exit
      _
    %233 = vsyncpa [#allocation3], 1
    %s234 = scalar_lea.sflag [#allocation3], 1
    %235 = vsyncpa %s234, 1
    %236 = vsyncpa [#allocation6], 1
    %s237 = scalar_lea.sflag [#allocation6], 1
    %238 = vsyncpa %s237, 1
    %239 = vsyncpa [#allocation4], 1
    %s240 = scalar_lea.sflag [#allocation4], 1
    %241 = vsyncpa %s240, 1

</llo_original>
